<compile_context>
chip_gen: v6e
topology: v6e:2x2x1
jax: 0.10.0
libtpu: 0.0.40
codegen_flags: <defaults>
</compile_context>

<pallas_src>
import numpy as np
import jax
import jax.numpy as jnp
from jax import lax
from jax.experimental import pallas as pl
from jax.experimental.pallas import tpu as pltpu

SQ23 = float(np.sqrt(2.0 / 3.0))


def build_kernel(ngp, gedof, hdim, c_p, c_q, eps=1e-12):
    third = 1.0 / 3.0
    crows = ngp * gedof                    # rows per Voigt component in B (32)

    def kernel(b_ref, u_ref, coef_ref, prm_ref, out_ref):
        T = out_ref.shape[-1]              # element-tile width (lanes)
        u = u_ref[...]                     # (8, T) f32 element DOFs
        coef = coef_ref[...]               # (ngp, T) f32 width * Jacc * gp_w

        def comp_f32(c):
            # One aligned 32-row bf16 slice per Voigt component (starts on a
            # 16-sublane bf16 tile boundary), converted on demand so only one
            # component's f32 copy needs to be live at a time.
            blk = b_ref[pl.ds(c * crows, crows), :].astype(jnp.float32)
            return blk.reshape(ngp, gedof, T)            # (ngp, 8, T)

        # --- strain = B_GP @ u_elem, batched over Gauss points -> (ngp, T) ---
        e0 = jnp.sum(comp_f32(0) * u[None, :, :], axis=1)
        e1 = jnp.sum(comp_f32(1) * u[None, :, :], axis=1)
        e2 = jnp.sum(comp_f32(2) * u[None, :, :], axis=1)

        # --- StrainInvarants, batched on (ngp, T) ---
        ev = e0 + e1
        d00 = e0 - ev * third
        d11 = e1 - ev * third
        d22 = -ev * third
        d01 = 0.5 * e2
        det2 = d00 * d00 + d11 * d11 + d22 * d22 + 2.0 * d01 * d01
        inv_det = lax.rsqrt(det2 + eps)    # EUP; eps guards det == 0 (padding)
        det = det2 * inv_det               # = sqrt(det2)
        n00 = d00 * inv_det
        n11 = d11 * inv_det
        n01 = d01 * inv_det

        # --- constitutive MLP 2 -> H (tanh) -> 2, batched over GPs ---
        # Normalization / output scaling / sqrt(2/3) are folded into the
        # packed parameters host-side; broadcasting is left implicit so no
        # (H, T) parameter copies are materialized.
        a0 = prm_ref[pl.ds(0 * hdim, hdim), :]           # (H, 1)
        a1 = prm_ref[pl.ds(1 * hdim, hdim), :]
        bb = prm_ref[pl.ds(2 * hdim, hdim), :]
        w20 = prm_ref[pl.ds(3 * hdim, hdim), :]
        w21 = prm_ref[pl.ds(4 * hdim, hdim), :]

        pre = (ev[:, None, :] * a0[None, :, :]
               + det[:, None, :] * a1[None, :, :]
               + bb[None, :, :])                         # (ngp, H, T)
        h = jnp.tanh(pre)
        p = jnp.sum(h * w20[None, :, :], axis=1) + c_p   # (ngp, T) pressure
        qs = jnp.sum(h * w21[None, :, :], axis=1) + c_q  # (ngp, T) sqrt(2/3)*q

        # --- InvarantsToStress with quadrature weight folded in (ngp, T) ---
        s0 = (p + qs * n00) * coef
        s1 = (p + qs * n11) * coef
        s2 = (qs * n01) * coef

        # --- E_P = sum_g B_GP^T @ stress_GP, batched over GPs -> (8, T) ---
        acc = jnp.sum(comp_f32(0) * s0[:, None, :], axis=0)
        acc = acc + jnp.sum(comp_f32(1) * s1[:, None, :], axis=0)
        acc = acc + jnp.sum(comp_f32(2) * s2[:, None, :], axis=0)
        out_ref[...] = acc

    return kernel


def choose_tile(ne):
    """Element-tile width: multiple of 128, >= 2 grid steps whenever possible
    (so both v7x TensorCores get work), capped at 2048 lanes."""
    ne128 = -(-ne // 128) * 128
    tile = min(2048, ne128)
    if ne128 >= 256:                       # leave >= 2 "parallel" grid steps
        tile = min(tile, ne128 // 2)
    tile = max(128, (tile // 128) * 128)
    return tile


def element_forces_pallas(B_lane, u_lane, coef_lane, params, *,
                          c_p, c_q, ngp, gedof, tile_ne):
    """B_lane: (3*ngp*gedof, NEp) bf16 (component-major), u_lane: (gedof, NEp)
    f32, coef_lane: (ngp, NEp) f32, params: (5*H, 1) f32 packed
    [a0; a1; bb; w20; w21] -> per-element forces (gedof, NEp) f32."""
    rows, ne_pad = B_lane.shape
    assert rows == 3 * ngp * gedof
    assert ne_pad % tile_ne == 0 and tile_ne % 128 == 0
    prows = params.shape[0]
    assert prows % 5 == 0
    hdim = prows // 5

    # VMEM budget from the actual tile footprint (double-buffered I/O tiles
    # plus headroom for the batched (ngp, H, T) MLP block and f32 B slices).
    bytes_io = 2 * (rows * tile_ne * 2            # B tile (bf16)
                    + gedof * tile_ne * 4         # u tile
                    + ngp * tile_ne * 4           # coef tile
                    + gedof * tile_ne * 4)        # out tile
    bytes_tmp = 6 * ngp * hdim * tile_ne * 4      # h + f32 B slices + headroom
    vmem_limit = int(min(max(bytes_io + bytes_tmp + (1 << 20), 16 << 20),
                         48 << 20))

    grid_spec = pltpu.PrefetchScalarGridSpec(
        num_scalar_prefetch=0,
        grid=(ne_pad // tile_ne,),
        in_specs=[
            pl.BlockSpec((rows, tile_ne), lambda i: (0, i)),   # B (bf16)
            pl.BlockSpec((gedof, tile_ne), lambda i: (0, i)),  # u_elem
            pl.BlockSpec((ngp, tile_ne), lambda i: (0, i)),    # width*Jacc*gp_w
            pl.BlockSpec((prows, 1), lambda i: (0, 0)),        # packed MLP params
        ],
        out_specs=pl.BlockSpec((gedof, tile_ne), lambda i: (0, i)),
    )
    return pl.pallas_call(
        build_kernel(ngp, gedof, hdim, c_p, c_q),
        out_shape=jax.ShapeDtypeStruct((gedof, ne_pad), jnp.float32),
        grid_spec=grid_spec,
        compiler_params=pltpu.CompilerParams(
            dimension_semantics=("parallel",),    # element tiles -> both TCs on v7x
            vmem_limit_bytes=vmem_limit,
        ),
    )(B_lane, u_lane, coef_lane, params)


def reference_forward(B_elem, u_elem, coef, W1, b1, W2, b2, consts, ENdof, NNode):
    """Plain-JAX reference mirroring the PyTorch forward (vectorized)."""
    si0, si1, li0, li1, sg0, sg1, lg0, lg1 = consts
    hi = jax.lax.Precision.HIGHEST
    strain = jnp.einsum('egij,ej->egi', B_elem, u_elem, precision=hi)  # (NE,NGP,3)
    e0, e1, e2 = strain[..., 0], strain[..., 1], strain[..., 2]
    ev = e0 + e1
    d00 = e0 - ev / 3.0
    d11 = e1 - ev / 3.0
    d22 = -ev / 3.0
    d01 = 0.5 * e2
    det = jnp.sqrt(d00 ** 2 + d11 ** 2 + d22 ** 2 + 2.0 * d01 ** 2)
    n00, n11, n01 = d00 / det, d11 / det, d01 / det
    es = det * SQ23
    ns0 = ev * si0 + li0
    ns1 = es * si1 + li1
    h = jnp.tanh(ns0[..., None] * W1[0] + ns1[..., None] * W1[1] + b1)
    g0 = jnp.sum(h * W2[:, 0], axis=-1) + b2[0]
    g1 = jnp.sum(h * W2[:, 1], axis=-1) + b2[1]
    p = (g0 - lg0) / sg0
    q = (g1 - lg1) / sg1
    stress = jnp.stack([p + SQ23 * q * n00, p + SQ23 * q * n11, SQ23 * q * n01], -1)
    gp_p = jnp.einsum('egij,egi->egj', B_elem, stress, precision=hi) * coef[..., None]
    E_P = gp_p.sum(axis=1)
    return jnp.zeros(NNode * 2, jnp.float32).at[ENdof.reshape(-1)].add(E_P.reshape(-1))


if __name__ == "__main__":
    key = jax.random.PRNGKey(0)
    k1, k2, k3, k4, k5, k6, k7, k8 = jax.random.split(key, 8)

    # --- FEM setup: 16x16 mesh of bilinear quads, 2D, 2x2 Gauss quadrature ---
    # 256 elements -> two full 128-lane tiles -> 2 "parallel" grid steps and
    # zero lane padding. (A 4x4 mesh would waste 87.5% of the lanes and is
    # better served by plain XLA — the kernel targets mesh sizes that fill
    # multiple tiles.)
    nelx = nely = 16
    nnx, nny = nelx + 1, nely + 1
    NNode = nnx * nny                       # 289 nodes
    NGP = 4
    GEDOF = 2 * 4                           # Dimension * nodes-per-element = 8
    width = 1.0
    gp_w = np.ones(NGP, dtype=np.float32)   # gp[-1] weights

    conn = []
    for j in range(nely):
        for i in range(nelx):
            n0 = j * nnx + i + 1            # 1-based node ids (as in ElementalNodeDof)
            conn.append([n0, n0 + 1, n0 + 1 + nnx, n0 + nnx])
    conn = np.asarray(conn, dtype=np.int32)                        # (NE, 4)
    NE = conn.shape[0]
    tmp1 = conn * 2 - 2
    tmp2 = conn * 2 - 1
    ENdof = np.stack([tmp1, tmp2], axis=-1).reshape(NE, GEDOF)     # (NE, 8) interleaved

    # Boundary conditions: bottom row of nodes fixed, rest free (NaN in BC_E)
    BC_E = np.full(NNode * 2, np.nan, dtype=np.float64)
    BC_E[: 2 * nnx] = 0.0
    IndexBCN = np.where(np.isnan(BC_E))[0]
    Ndof = IndexBCN.size                    # free DOFs -> len(weight1)

    # Synthetic deterministic Node / Element data
    u_torch = jax.random.normal(k1, (NNode * 2,), dtype=jnp.float32)
    B_elem = 0.5 * jax.random.normal(k2, (NE, NGP, 3, GEDOF), dtype=jnp.float32)
    Jacc = 0.2 + 0.3 * jax.random.uniform(k3, (NE, NGP), dtype=jnp.float32)

    # NNModel2 parameter: weight1 = randn(Ndof) / 10
    weight1 = jax.random.normal(k4, (Ndof,), dtype=jnp.float32) / 10.0

    # Constitutive "model": MLP weights + normalization constants
    H = 32
    W1 = 0.3 * jax.random.normal(k5, (2, H), dtype=jnp.float32)
    b1 = 0.1 * jax.random.normal(k6, (H,), dtype=jnp.float32)
    W2 = 0.3 * jax.random.normal(k7, (H, 2), dtype=jnp.float32)
    b2 = 0.1 * jax.random.normal(k8, (2,), dtype=jnp.float32)
    consts = (2.0, 3.0,      # scales_inp
              -1.0, 0.5,     # limits_inp
              1.5, 2.5,      # scales_grad
              0.1, -0.2)     # limits_grad
    si0, si1, li0, li1, sg0, sg1, lg0, lg1 = consts

    # ---- glue: Node.u_torch1, element-DOF gather, per-GP coefficients ----
    u1 = jnp.zeros(NNode * 2, jnp.float32).at[IndexBCN].set(
        weight1 * u_torch[IndexBCN])
    u_elem = u1[ENdof]                                              # (NE, 8)
    coef = (width * Jacc * gp_w[None, :]).astype(jnp.float32)       # (NE, NGP)

    # B stored bf16 in HBM; the reference uses the same quantized values so
    # the check compares like-for-like.
    B_bf16 = B_elem.astype(jnp.bfloat16)
    B_q32 = B_bf16.astype(jnp.float32)

    # ---- lane-dense layouts: elements on lanes, component-major B rows ----
    TILE_NE = choose_tile(NE)
    NE_pad = -(-NE // TILE_NE) * TILE_NE
    pad = NE_pad - NE

    # row index = component*(NGP*GEDOF) + gp*GEDOF + dof  ->  (96, NE_pad) bf16
    B_lane = jnp.pad(
        jnp.transpose(B_bf16, (2, 1, 3, 0)).reshape(3 * NGP * GEDOF, NE),
        ((0, 0), (0, pad)))
    u_lane = jnp.pad(u_elem.T, ((0, 0), (0, pad)))                  # (8, NE_pad)
    coef_lane = jnp.pad(coef.T, ((0, 0), (0, pad)))                 # (NGP, NE_pad)

    # ---- host-side folding of normalization / output scaling into MLP params ----
    W1n, b1n = np.asarray(W1, np.float64), np.asarray(b1, np.float64)
    W2n, b2n = np.asarray(W2, np.float64), np.asarray(b2, np.float64)
    a0c = (si0 * W1n[0]).reshape(H, 1)
    a1c = (SQ23 * si1 * W1n[1]).reshape(H, 1)
    bbc = (li0 * W1n[0] + li1 * W1n[1] + b1n).reshape(H, 1)
    w20c = (W2n[:, 0] / sg0).reshape(H, 1)
    w21c = (SQ23 * W2n[:, 1] / sg1).reshape(H, 1)
    params = jnp.asarray(
        np.concatenate([a0c, a1c, bbc, w20c, w21c], axis=0).astype(np.float32))
    c_p = float((b2n[0] - lg0) / sg0)
    c_q = float(SQ23 * (b2n[1] - lg1) / sg1)

    # ---- Pallas kernel: per-element-tile constitutive + force integration ----
    out = element_forces_pallas(
        B_lane, u_lane, coef_lane, params,
        c_p=c_p, c_q=c_q, ngp=NGP, gedof=GEDOF, tile_ne=TILE_NE)
    E_P = out[:, :NE].T                                             # (NE, 8)

    # ---- AssembleageForce (scatter-add; glue) ----
    Global_F = jnp.zeros(NNode * 2, jnp.float32).at[ENdof.reshape(-1)].add(
        E_P.reshape(-1))
    Global_F = jax.block_until_ready(Global_F)

    # Sanity check against a plain-JAX reference of the same forward pass
    # (same bf16-quantized B, f32 math).
    F_ref = reference_forward(B_q32, u_elem, coef, W1, b1, W2, b2, consts,
                              ENdof, NNode)
    F_ref = jax.block_until_ready(F_ref)
    assert np.allclose(np.asarray(Global_F), np.asarray(F_ref),
                       rtol=1e-3, atol=1e-4), "mismatch vs reference"

    print("KERNEL_OK")
</pallas_src>

<mosaic_0001>
module attributes {stable_mosaic.version = 11 : i64} {
  func.func @kernel(%arg0: i32, %arg1: memref<96x128xbf16, #tpu.memory_space<vmem>>, %arg2: memref<8x128xf32, #tpu.memory_space<vmem>>, %arg3: memref<4x128xf32, #tpu.memory_space<vmem>>, %arg4: memref<160x1xf32, #tpu.memory_space<vmem>>, %arg5: memref<8x128xf32, #tpu.memory_space<vmem>>) attributes {dimension_semantics = [#tpu.dimension_semantics<parallel>], iteration_bounds = array<i64: 2>, scalar_prefetch = 0 : i64, scratch_operands = 0 : i64, tpu.core_type = #tpu.core_type<tc>, window_params = [{transform_indices = @transform_0, window_bounds = array<i64: 96, 128>}, {transform_indices = @transform_1, window_bounds = array<i64: 8, 128>}, {transform_indices = @transform_2, window_bounds = array<i64: 4, 128>}, {pipeline_mode = #tpu.pipeline_mode<synchronous>, transform_indices = @transform_3, window_bounds = array<i64: 160, 1>}, {transform_indices = @transform_4, window_bounds = array<i64: 8, 128>}]} {
    %c0 = arith.constant 0 : index
    %c0_0 = arith.constant 0 : index
    %0 = vector.load %arg2[%c0, %c0_0] : memref<8x128xf32, #tpu.memory_space<vmem>>, vector<8x128xf32>
    %c0_1 = arith.constant 0 : index
    %c0_2 = arith.constant 0 : index
    %1 = vector.load %arg3[%c0_1, %c0_2] : memref<4x128xf32, #tpu.memory_space<vmem>>, vector<4x128xf32>
    %c0_3 = arith.constant 0 : index
    %c0_4 = arith.constant 0 : index
    %2 = vector.load %arg1[%c0_3, %c0_4] : memref<96x128xbf16, #tpu.memory_space<vmem>>, vector<32x128xbf16>
    %3 = arith.extf %2 : vector<32x128xbf16> to vector<32x128xf32>
    %4 = vector.shape_cast %3 : vector<32x128xf32> to vector<4x8x128xf32>
    %5 = vector.shape_cast %0 : vector<8x128xf32> to vector<1x8x128xf32>
    %6 = vector.broadcast %5 : vector<1x8x128xf32> to vector<4x8x128xf32>
    %7 = arith.mulf %4, %6 : vector<4x8x128xf32>
    %cst = arith.constant dense<0.000000e+00> : vector<4x128xf32>
    %8 = vector.multi_reduction <add>, %7, %cst [1] : vector<4x8x128xf32> to vector<4x128xf32>
    %c32 = arith.constant 32 : index
    %c0_5 = arith.constant 0 : index
    %9 = vector.load %arg1[%c32, %c0_5] : memref<96x128xbf16, #tpu.memory_space<vmem>>, vector<32x128xbf16>
    %10 = arith.extf %9 : vector<32x128xbf16> to vector<32x128xf32>
    %11 = vector.shape_cast %10 : vector<32x128xf32> to vector<4x8x128xf32>
    %12 = vector.shape_cast %0 : vector<8x128xf32> to vector<1x8x128xf32>
    %13 = vector.broadcast %12 : vector<1x8x128xf32> to vector<4x8x128xf32>
    %14 = arith.mulf %11, %13 : vector<4x8x128xf32>
    %cst_6 = arith.constant dense<0.000000e+00> : vector<4x128xf32>
    %15 = vector.multi_reduction <add>, %14, %cst_6 [1] : vector<4x8x128xf32> to vector<4x128xf32>
    %c64 = arith.constant 64 : index
    %c0_7 = arith.constant 0 : index
    %16 = vector.load %arg1[%c64, %c0_7] : memref<96x128xbf16, #tpu.memory_space<vmem>>, vector<32x128xbf16>
    %17 = arith.extf %16 : vector<32x128xbf16> to vector<32x128xf32>
    %18 = vector.shape_cast %17 : vector<32x128xf32> to vector<4x8x128xf32>
    %19 = vector.shape_cast %0 : vector<8x128xf32> to vector<1x8x128xf32>
    %20 = vector.broadcast %19 : vector<1x8x128xf32> to vector<4x8x128xf32>
    %21 = arith.mulf %18, %20 : vector<4x8x128xf32>
    %cst_8 = arith.constant dense<0.000000e+00> : vector<4x128xf32>
    %22 = vector.multi_reduction <add>, %21, %cst_8 [1] : vector<4x8x128xf32> to vector<4x128xf32>
    %23 = arith.addf %8, %15 : vector<4x128xf32>
    %cst_9 = arith.constant 0.333333343 : f32
    %24 = vector.broadcast %cst_9 : f32 to vector<4x128xf32>
    %25 = arith.mulf %23, %24 : vector<4x128xf32>
    %26 = arith.subf %8, %25 : vector<4x128xf32>
    %cst_10 = arith.constant 0.333333343 : f32
    %27 = vector.broadcast %cst_10 : f32 to vector<4x128xf32>
    %28 = arith.mulf %23, %27 : vector<4x128xf32>
    %29 = arith.subf %15, %28 : vector<4x128xf32>
    %cst_11 = arith.constant 0.000000e+00 : f32
    %30 = vector.broadcast %cst_11 : f32 to vector<4x128xf32>
    %31 = arith.subf %30, %23 : vector<4x128xf32>
    %cst_12 = arith.constant 0.333333343 : f32
    %32 = vector.broadcast %cst_12 : f32 to vector<4x128xf32>
    %33 = arith.mulf %31, %32 : vector<4x128xf32>
    %cst_13 = arith.constant 5.000000e-01 : f32
    %34 = vector.broadcast %cst_13 : f32 to vector<4x128xf32>
    %35 = arith.mulf %34, %22 : vector<4x128xf32>
    %36 = arith.mulf %26, %26 : vector<4x128xf32>
    %37 = arith.mulf %29, %29 : vector<4x128xf32>
    %38 = arith.addf %36, %37 : vector<4x128xf32>
    %39 = arith.mulf %33, %33 : vector<4x128xf32>
    %40 = arith.addf %38, %39 : vector<4x128xf32>
    %cst_14 = arith.constant 2.000000e+00 : f32
    %41 = vector.broadcast %cst_14 : f32 to vector<4x128xf32>
    %42 = arith.mulf %41, %35 : vector<4x128xf32>
    %43 = arith.mulf %42, %35 : vector<4x128xf32>
    %44 = arith.addf %40, %43 : vector<4x128xf32>
    %cst_15 = arith.constant 9.99999996E-13 : f32
    %45 = vector.broadcast %cst_15 : f32 to vector<4x128xf32>
    %46 = arith.addf %44, %45 : vector<4x128xf32>
    %47 = math.rsqrt %46 : vector<4x128xf32>
    %48 = arith.mulf %44, %47 : vector<4x128xf32>
    %49 = arith.mulf %26, %47 : vector<4x128xf32>
    %50 = arith.mulf %29, %47 : vector<4x128xf32>
    %51 = arith.mulf %35, %47 : vector<4x128xf32>
    %c0_16 = arith.constant 0 : index
    %c0_17 = arith.constant 0 : index
    %52 = vector.load %arg4[%c0_16, %c0_17] : memref<160x1xf32, #tpu.memory_space<vmem>>, vector<32x1xf32>
    %c32_18 = arith.constant 32 : index
    %c0_19 = arith.constant 0 : index
    %53 = vector.load %arg4[%c32_18, %c0_19] : memref<160x1xf32, #tpu.memory_space<vmem>>, vector<32x1xf32>
    %c64_20 = arith.constant 64 : index
    %c0_21 = arith.constant 0 : index
    %54 = vector.load %arg4[%c64_20, %c0_21] : memref<160x1xf32, #tpu.memory_space<vmem>>, vector<32x1xf32>
    %c96 = arith.constant 96 : index
    %c0_22 = arith.constant 0 : index
    %55 = vector.load %arg4[%c96, %c0_22] : memref<160x1xf32, #tpu.memory_space<vmem>>, vector<32x1xf32>
    %c128 = arith.constant 128 : index
    %c0_23 = arith.constant 0 : index
    %56 = vector.load %arg4[%c128, %c0_23] : memref<160x1xf32, #tpu.memory_space<vmem>>, vector<32x1xf32>
    %57 = vector.shape_cast %23 : vector<4x128xf32> to vector<4x1x128xf32>
    %58 = vector.shape_cast %52 : vector<32x1xf32> to vector<1x32x1xf32>
    %59 = vector.broadcast %57 : vector<4x1x128xf32> to vector<4x32x128xf32>
    %60 = vector.broadcast %58 : vector<1x32x1xf32> to vector<4x32x128xf32>
    %61 = arith.mulf %59, %60 : vector<4x32x128xf32>
    %62 = vector.shape_cast %48 : vector<4x128xf32> to vector<4x1x128xf32>
    %63 = vector.shape_cast %53 : vector<32x1xf32> to vector<1x32x1xf32>
    %64 = vector.broadcast %62 : vector<4x1x128xf32> to vector<4x32x128xf32>
    %65 = vector.broadcast %63 : vector<1x32x1xf32> to vector<4x32x128xf32>
    %66 = arith.mulf %64, %65 : vector<4x32x128xf32>
    %67 = arith.addf %61, %66 : vector<4x32x128xf32>
    %68 = vector.shape_cast %54 : vector<32x1xf32> to vector<1x32x1xf32>
    %69 = vector.broadcast %68 : vector<1x32x1xf32> to vector<4x32x128xf32>
    %70 = arith.addf %67, %69 : vector<4x32x128xf32>
    %71 = math.tanh %70 : vector<4x32x128xf32>
    %72 = vector.shape_cast %55 : vector<32x1xf32> to vector<1x32x1xf32>
    %73 = vector.broadcast %72 : vector<1x32x1xf32> to vector<4x32x128xf32>
    %74 = arith.mulf %71, %73 : vector<4x32x128xf32>
    %cst_24 = arith.constant dense<0.000000e+00> : vector<4x128xf32>
    %75 = vector.multi_reduction <add>, %74, %cst_24 [1] : vector<4x32x128xf32> to vector<4x128xf32>
    %cst_25 = arith.constant -0.0708393678 : f32
    %76 = vector.broadcast %cst_25 : f32 to vector<4x128xf32>
    %77 = arith.addf %75, %76 : vector<4x128xf32>
    %78 = vector.shape_cast %56 : vector<32x1xf32> to vector<1x32x1xf32>
    %79 = vector.broadcast %78 : vector<1x32x1xf32> to vector<4x32x128xf32>
    %80 = arith.mulf %71, %79 : vector<4x32x128xf32>
    %cst_26 = arith.constant dense<0.000000e+00> : vector<4x128xf32>
    %81 = vector.multi_reduction <add>, %80, %cst_26 [1] : vector<4x32x128xf32> to vector<4x128xf32>
    %cst_27 = arith.constant 0.0175892655 : f32
    %82 = vector.broadcast %cst_27 : f32 to vector<4x128xf32>
    %83 = arith.addf %81, %82 : vector<4x128xf32>
    %84 = arith.mulf %83, %49 : vector<4x128xf32>
    %85 = arith.addf %77, %84 : vector<4x128xf32>
    %86 = arith.mulf %85, %1 : vector<4x128xf32>
    %87 = arith.mulf %83, %50 : vector<4x128xf32>
    %88 = arith.addf %77, %87 : vector<4x128xf32>
    %89 = arith.mulf %88, %1 : vector<4x128xf32>
    %90 = arith.mulf %83, %51 : vector<4x128xf32>
    %91 = arith.mulf %90, %1 : vector<4x128xf32>
    %c0_28 = arith.constant 0 : index
    %c0_29 = arith.constant 0 : index
    %92 = vector.load %arg1[%c0_28, %c0_29] : memref<96x128xbf16, #tpu.memory_space<vmem>>, vector<32x128xbf16>
    %93 = arith.extf %92 : vector<32x128xbf16> to vector<32x128xf32>
    %94 = vector.shape_cast %93 : vector<32x128xf32> to vector<4x8x128xf32>
    %95 = vector.shape_cast %86 : vector<4x128xf32> to vector<4x1x128xf32>
    %96 = vector.broadcast %95 : vector<4x1x128xf32> to vector<4x8x128xf32>
    %97 = arith.mulf %94, %96 : vector<4x8x128xf32>
    %cst_30 = arith.constant dense<0.000000e+00> : vector<8x128xf32>
    %98 = vector.multi_reduction <add>, %97, %cst_30 [0] : vector<4x8x128xf32> to vector<8x128xf32>
    %c32_31 = arith.constant 32 : index
    %c0_32 = arith.constant 0 : index
    %99 = vector.load %arg1[%c32_31, %c0_32] : memref<96x128xbf16, #tpu.memory_space<vmem>>, vector<32x128xbf16>
    %100 = arith.extf %99 : vector<32x128xbf16> to vector<32x128xf32>
    %101 = vector.shape_cast %100 : vector<32x128xf32> to vector<4x8x128xf32>
    %102 = vector.shape_cast %89 : vector<4x128xf32> to vector<4x1x128xf32>
    %103 = vector.broadcast %102 : vector<4x1x128xf32> to vector<4x8x128xf32>
    %104 = arith.mulf %101, %103 : vector<4x8x128xf32>
    %cst_33 = arith.constant dense<0.000000e+00> : vector<8x128xf32>
    %105 = vector.multi_reduction <add>, %104, %cst_33 [0] : vector<4x8x128xf32> to vector<8x128xf32>
    %106 = arith.addf %98, %105 : vector<8x128xf32>
    %c64_34 = arith.constant 64 : index
    %c0_35 = arith.constant 0 : index
    %107 = vector.load %arg1[%c64_34, %c0_35] : memref<96x128xbf16, #tpu.memory_space<vmem>>, vector<32x128xbf16>
    %108 = arith.extf %107 : vector<32x128xbf16> to vector<32x128xf32>
    %109 = vector.shape_cast %108 : vector<32x128xf32> to vector<4x8x128xf32>
    %110 = vector.shape_cast %91 : vector<4x128xf32> to vector<4x1x128xf32>
    %111 = vector.broadcast %110 : vector<4x1x128xf32> to vector<4x8x128xf32>
    %112 = arith.mulf %109, %111 : vector<4x8x128xf32>
    %cst_36 = arith.constant dense<0.000000e+00> : vector<8x128xf32>
    %113 = vector.multi_reduction <add>, %112, %cst_36 [0] : vector<4x8x128xf32> to vector<8x128xf32>
    %114 = arith.addf %106, %113 : vector<8x128xf32>
    %c0_37 = arith.constant 0 : index
    %c0_38 = arith.constant 0 : index
    %115 = vector.load %arg5[%c0_37, %c0_38] : memref<8x128xf32, #tpu.memory_space<vmem>>, vector<8x128xf32>
    tpu.vector_store %arg5[%c0_37, %c0_38], %114 {strides = array<i32>} : memref<8x128xf32, #tpu.memory_space<vmem>>, vector<8x128xf32>,
    return
  }
  func.func @transform_0(%arg0: i32) -> (i32, i32) {
    %c0_i32 = arith.constant 0 : i32
    %c0_i32_0 = arith.constant 0 : i32
    return %c0_i32, %arg0 : i32, i32
  }
  func.func @transform_1(%arg0: i32) -> (i32, i32) {
    %c0_i32 = arith.constant 0 : i32
    %c0_i32_0 = arith.constant 0 : i32
    return %c0_i32, %arg0 : i32, i32
  }
  func.func @transform_2(%arg0: i32) -> (i32, i32) {
    %c0_i32 = arith.constant 0 : i32
    %c0_i32_0 = arith.constant 0 : i32
    return %c0_i32, %arg0 : i32, i32
  }
  func.func @transform_3(%arg0: i32) -> (i32, i32) {
    %c0_i32 = arith.constant 0 : i32
    %c0_i32_0 = arith.constant 0 : i32
    %c0_i32_1 = arith.constant 0 : i32
    return %c0_i32, %c0_i32_0 : i32, i32
  }
  func.func @transform_4(%arg0: i32) -> (i32, i32) {
    %c0_i32 = arith.constant 0 : i32
    %c0_i32_0 = arith.constant 0 : i32
    return %c0_i32, %arg0 : i32, i32
  }
}

</mosaic_0001>

<llo_original>
// kernel: tpu_custom_call.1
$region0: #{tpu_custom_call.1}
  #allocation0 [shape = 'u32[]', space=smem, size = 0x4, offset = 0x4, fixed_abs, tag = 'smem constant byte address 0x4 - core index']
  #allocation1 [shape = 'u32[144,128]{1,0:T(1,128)}', space=vmem, size = 0x12000, scoped, tag = 'internal scratch']
  %s0 = inlined_call_operand.vmem [shape: bf16[96,256], index: 0, kind: input, shape index: {}]
  %s1 = inlined_call_operand.vmem [shape: f32[8,256], index: 1, kind: input, shape index: {}]
  %s2 = inlined_call_operand.vmem [shape: f32[4,256], index: 2, kind: input, shape index: {}]
  %s3 = inlined_call_operand.vmem [shape: f32[160,1], index: 3, kind: input, shape index: {}]
  %s4 = inlined_call_operand.hbm [shape: f32[8,256], index: 4, kind: output, shape index: {}]
  %s5 = sld [smem:[#allocation0]]
  $region90: #{tpu_custom_call.1} parent=0
    _
  %s7 = ssub.s32 1, %s5
  %s8 = scalar_select 0, %s7, %s5
  $region1: #{tpu_custom_call.1} parent=0
    #allocation2 [shape = 'u8[49152]{0}', space=vmem, size = 0xc000, scoped, tag = 'input window, operand 0']
    #allocation3 [shape = 'u8[8192]{0}', space=vmem, size = 0x2000, scoped, tag = 'output window, operand 0']
    #allocation4 [shape = 's32[2]{0}', space=sflag, size = 0x8, scoped, tag = 'scoped memory for tpu_custom_call.1']
    %9 = vsyncpa [#allocation4], 0
    %s10 = scalar_lea.sflag [#allocation4], 1
    %11 = vsyncpa %s10, 0
    loop: start=0, step=1, limit=4
    $region2: #{tpu_custom_call.1} parent=1 // loop_pre_header
      _
    $region3: #{tpu_custom_call.1} parent=1 // loop_header
      %s13 = sphi 0, %s17
      %p14 = scmp.ge.s32.totalorder %s13, 4
      %s23 = sphi 0, %s25
      %s26 = sphi 0, %s23
      %s27 = sphi 0, %s26
      %s43 = sphi 0, %s27
      %s49 = sphi 0, %s51
      %s52 = sphi 0, %s49
      %s53 = sphi 0, %s52
      %s69 = sphi 0, %s53
      %s75 = sphi 0, %s77
      %s78 = sphi 0, %s75
      %s79 = sphi 0, %s78
      %s95 = sphi 0, %s79
      %s99 = sphi 0, %s99
      %s101 = sphi 0, %s99
      %s102 = sphi 0, %s101
      %s116 = sphi 0, %s102
      %s122 = sphi 0, %s124
      %s125 = sphi 0, %s122
      %s126 = sphi 0, %s125
      %s142 = sphi 0, %s126
    $region4: #{tpu_custom_call.1} parent=1 // loop_header_branch
      %16 = sbr.rel (%p14) target = $region8
    $region5: #{tpu_custom_call.1} parent=1 // loop_body
      %s18 = ssub.s32 %s13, 1
      %s19 = ssub.s32 %s13, 2
      %s20 = sadd.s32 %s13, 1
      %s21 = ssub.s32 %s13, %s20
      %p22 = scmp.eq.s32.totalorder %s21, 0
      %s24 = sadd.s32 %s23, 1
      %s25 = scalar_select %p22, %s23, %s24
      %p28 = pneg %p22
      %p29 = scmp.eq.s32.totalorder %s13, 1
      %p30 = por %p28, %p29
      %p31 = scmp.ne.s32.totalorder %s23, %s26
      %p32 = scmp.eq.s32.totalorder %s13, 0
      %p33 = por %p31, %p32
      %p34 = scmp.ne.s32.totalorder %s23, %s26
      %p35 = scmp.eq.s32.totalorder %s18, 1
      %p36 = por %p34, %p35
      %p37 = scmp.ne.s32.totalorder %s26, %s27
      %p38 = scmp.eq.s32.totalorder %s18, 0
      %p39 = por %p37, %p38
      %p40 = scmp.ne.s32.totalorder %s26, %s27
      %p41 = scmp.eq.s32.totalorder %s19, 1
      %p42 = por %p40, %p41
      %p44 = scmp.ne.s32.totalorder %s27, %s43
      %p45 = scmp.eq.s32.totalorder %s19, 0
      %p46 = por %p44, %p45
      %s47 = ssub.s32 %s13, %s20
      %p48 = scmp.eq.s32.totalorder %s47, 0
      %s50 = sadd.s32 %s49, 1
      %s51 = scalar_select %p48, %s49, %s50
      %p54 = pneg %p48
      %p55 = scmp.eq.s32.totalorder %s13, 1
      %p56 = por %p54, %p55
      %p57 = scmp.ne.s32.totalorder %s49, %s52
      %p58 = scmp.eq.s32.totalorder %s13, 0
      %p59 = por %p57, %p58
      %p60 = scmp.ne.s32.totalorder %s49, %s52
      %p61 = scmp.eq.s32.totalorder %s18, 1
      %p62 = por %p60, %p61
      %p63 = scmp.ne.s32.totalorder %s52, %s53
      %p64 = scmp.eq.s32.totalorder %s18, 0
      %p65 = por %p63, %p64
      %p66 = scmp.ne.s32.totalorder %s52, %s53
      %p67 = scmp.eq.s32.totalorder %s19, 1
      %p68 = por %p66, %p67
      %p70 = scmp.ne.s32.totalorder %s53, %s69
      %p71 = scmp.eq.s32.totalorder %s19, 0
      %p72 = por %p70, %p71
      %s73 = ssub.s32 %s13, %s20
      %p74 = scmp.eq.s32.totalorder %s73, 0
      %s76 = sadd.s32 %s75, 1
      %s77 = scalar_select %p74, %s75, %s76
      %p80 = pneg %p74
      %p81 = scmp.eq.s32.totalorder %s13, 1
      %p82 = por %p80, %p81
      %p83 = scmp.ne.s32.totalorder %s75, %s78
      %p84 = scmp.eq.s32.totalorder %s13, 0
      %p85 = por %p83, %p84
      %p86 = scmp.ne.s32.totalorder %s75, %s78
      %p87 = scmp.eq.s32.totalorder %s18, 1
      %p88 = por %p86, %p87
      %p89 = scmp.ne.s32.totalorder %s78, %s79
      %p90 = scmp.eq.s32.totalorder %s18, 0
      %p91 = por %p89, %p90
      %p92 = scmp.ne.s32.totalorder %s78, %s79
      %p93 = scmp.eq.s32.totalorder %s19, 1
      %p94 = por %p92, %p93
      %p96 = scmp.ne.s32.totalorder %s79, %s95
      %p97 = scmp.eq.s32.totalorder %s19, 0
      %p98 = por %p96, %p97
      %s100 = sadd.s32 %s99, 1
      %p103 = scmp.eq.s32.totalorder %s13, 1
      %p104 = scmp.ne.s32.totalorder %s99, %s101
      %p105 = scmp.eq.s32.totalorder %s13, 0
      %p106 = por %p104, %p105
      %p107 = scmp.ne.s32.totalorder %s99, %s101
      %p108 = scmp.eq.s32.totalorder %s18, 1
      %p109 = por %p107, %p108
      %p110 = scmp.ne.s32.totalorder %s101, %s102
      %p111 = scmp.eq.s32.totalorder %s18, 0
      %p112 = por %p110, %p111
      %p113 = scmp.ne.s32.totalorder %s101, %s102
      %p114 = scmp.eq.s32.totalorder %s19, 1
      %p115 = por %p113, %p114
      %p117 = scmp.ne.s32.totalorder %s102, %s116
      %p118 = scmp.eq.s32.totalorder %s19, 0
      %p119 = por %p117, %p118
      %s120 = ssub.s32 %s13, %s20
      %p121 = scmp.eq.s32.totalorder %s120, 0
      %s123 = sadd.s32 %s122, 1
      %s124 = scalar_select %p121, %s122, %s123
      %p127 = pneg %p121
      %p128 = scmp.eq.s32.totalorder %s13, 1
      %p129 = por %p127, %p128
      %p130 = scmp.ne.s32.totalorder %s122, %s125
      %p131 = scmp.eq.s32.totalorder %s13, 0
      %p132 = por %p130, %p131
      %p133 = scmp.ne.s32.totalorder %s122, %s125
      %p134 = scmp.eq.s32.totalorder %s18, 1
      %p135 = por %p133, %p134
      %p136 = scmp.ne.s32.totalorder %s125, %s126
      %p137 = scmp.eq.s32.totalorder %s18, 0
      %p138 = por %p136, %p137
      %p139 = scmp.ne.s32.totalorder %s125, %s126
      %p140 = scmp.eq.s32.totalorder %s19, 1
      %p141 = por %p139, %p140
      %p143 = scmp.ne.s32.totalorder %s126, %s142
      %p144 = scmp.eq.s32.totalorder %s19, 0
      %p145 = por %p143, %p144
      %p146 = scmp.le.s32.totalorder 1, %s13
      %p147 = scmp.lt.s32.totalorder %s13, 3
      %p148 = pnand %p146, %p147
      %p149 = pneg %p148
      // Predicated region
      $region9: #{tpu_custom_call.1} parent=5 // pred_check
        _
      $region10: #{tpu_custom_call.1} parent=5 // pred_check_branch
        %151 = sbr.rel (%p148) target = $region12
      $region11: #{tpu_custom_call.1} parent=5 // pred_region
        %s152 = ssub.s32 %s13, 1
        // Predicated region
        $region13: #{tpu_custom_call.1} parent=11 // pred_check
          %p153 = pneg %p112
        $region14: #{tpu_custom_call.1} parent=11 // pred_check_branch
          %155 = sbr.rel (%p153) target = $region16
        $region15: #{tpu_custom_call.1} parent=11 // pred_region
          _
        $region16: #{tpu_custom_call.1} parent=11 // pred_fallthru
          _
      $region12: #{tpu_custom_call.1} parent=5 // pred_fallthru
        _
      %p156 = scmp.lt.s32.totalorder %s13, 2
      // Predicated region
      $region17: #{tpu_custom_call.1} parent=5 // pred_check
        %p157 = pneg %p156
      $region18: #{tpu_custom_call.1} parent=5 // pred_check_branch
        %159 = sbr.rel (%p157) target = $region20
      $region19: #{tpu_custom_call.1} parent=5 // pred_region
        // Predicated region
        $region21: #{tpu_custom_call.1} parent=19 // pred_check
          %p160 = pneg %p33
        $region22: #{tpu_custom_call.1} parent=19 // pred_check_branch
          %162 = sbr.rel (%p160) target = $region24
        $region23: #{tpu_custom_call.1} parent=19 // pred_region
          %s163 = sand.u32 %s23, 1
          %s164 = sand.u32 %s23, 1
          %s165 = smul.addr %s164, 48
          %s166 = scalar_lea.vmem [#allocation2], %s165
          %s167 = smul.addr %s13, 4
          %s168 = scalar_lea.vmem %s0, %s167
          // Predicated region
          $region25: #{tpu_custom_call.1} parent=23 // pred_check
            _
          $region26: #{tpu_custom_call.1} parent=23 // pred_check_branch
            %170 = sbr.rel (0) target = $region28
          $region27: #{tpu_custom_call.1} parent=23 // pred_region
            // Predicated region
            $region29: #{tpu_custom_call.1} parent=27 // pred_check
              _
            $region30: #{tpu_custom_call.1} parent=27 // pred_check_branch
              %172 = sbr.rel target = $region32
            $region31: #{tpu_custom_call.1} parent=27 // pred_region
              // Predicated region
              $region44: #{tpu_custom_call.1} parent=31 // pred_check
                _
              $region45: #{tpu_custom_call.1} parent=31 // pred_check_branch
                %210 = sbr.rel (0) target = $region47
              $region46: #{tpu_custom_call.1} parent=31 // pred_region
                loop: start=0, step=1, limit=1
                $region48: #{tpu_custom_call.1} parent=46 // loop_pre_header
                  _
                $region49: #{tpu_custom_call.1} parent=46 // loop_header
                  %s212 = sphi 0, %s216
                  %p213 = scmp.ge.s32.totalorder %s212, 1
                  %s217 = sphi %s168, %s168
                  %s218 = sphi %s166, %s166
                $region50: #{tpu_custom_call.1} parent=46 // loop_header_branch
                  %215 = sbr.rel (%p213) target = $region54
                $region51: #{tpu_custom_call.1} parent=46 // loop_body
                  _
                $region52: #{tpu_custom_call.1} parent=46 // loop_footer
                  %s216 = sadd.s32 1, %s212
                $region53: #{tpu_custom_call.1} parent=46 // loop_footer_branch
                  %211 = sbr.rel target = $region49
                $region54: #{tpu_custom_call.1} parent=46 // loop_exit
                  _
                %s220 = ssub.s32 16, 1
                loop: start=0, step=1, limit=1
                $region55: #{tpu_custom_call.1} parent=46 // loop_pre_header
                  _
                $region56: #{tpu_custom_call.1} parent=46 // loop_header
                  %s222 = sphi 0, %s226
                  %p223 = scmp.ge.s32.totalorder %s222, 1
                  %s227 = sphi %s168, %s168
                  %s228 = sphi %s166, %s166
                $region57: #{tpu_custom_call.1} parent=46 // loop_header_branch
                  %225 = sbr.rel (%p223) target = $region61
                $region58: #{tpu_custom_call.1} parent=46 // loop_body
                  %v229 = vld [vmem:[%s227] sm:%s220]
                  %230 = vst [vmem:[%s228] sm:%s220] %v229
                  %v231 = vld [vmem:[%s227 + $0x8] sm:%s220]
                  %232 = vst [vmem:[%s228 + $0x4] sm:%s220] %v231
                  %v233 = vld [vmem:[%s227 + $0x10] sm:%s220]
                  %234 = vst [vmem:[%s228 + $0x8] sm:%s220] %v233
                  %v235 = vld [vmem:[%s227 + $0x18] sm:%s220]
                  %236 = vst [vmem:[%s228 + $0xc] sm:%s220] %v235
                  %v237 = vld [vmem:[%s227 + $0x20] sm:%s220]
                  %238 = vst [vmem:[%s228 + $0x10] sm:%s220] %v237
                  %v239 = vld [vmem:[%s227 + $0x28] sm:%s220]
                  %240 = vst [vmem:[%s228 + $0x14] sm:%s220] %v239
                  %v241 = vld [vmem:[%s227 + $0x30] sm:%s220]
                  %242 = vst [vmem:[%s228 + $0x18] sm:%s220] %v241
                  %v243 = vld [vmem:[%s227 + $0x38] sm:%s220]
                  %244 = vst [vmem:[%s228 + $0x1c] sm:%s220] %v243
                  %v245 = vld [vmem:[%s227 + $0x40] sm:%s220]
                  %246 = vst [vmem:[%s228 + $0x20] sm:%s220] %v245
                  %v247 = vld [vmem:[%s227 + $0x48] sm:%s220]
                  %248 = vst [vmem:[%s228 + $0x24] sm:%s220] %v247
                  %v249 = vld [vmem:[%s227 + $0x50] sm:%s220]
                  %250 = vst [vmem:[%s228 + $0x28] sm:%s220] %v249
                  %v251 = vld [vmem:[%s227 + $0x58] sm:%s220]
                  %252 = vst [vmem:[%s228 + $0x2c] sm:%s220] %v251
                $region59: #{tpu_custom_call.1} parent=46 // loop_footer
                  %s226 = sadd.s32 1, %s222
                $region60: #{tpu_custom_call.1} parent=46 // loop_footer_branch
                  %221 = sbr.rel target = $region56
                $region61: #{tpu_custom_call.1} parent=46 // loop_exit
                  _
              $region47: #{tpu_custom_call.1} parent=31 // pred_fallthru
                _
            $region32: #{tpu_custom_call.1} parent=27 // pred_fallthru
              _
            // Predicated region
            $region33: #{tpu_custom_call.1} parent=27 // pred_check
              _
            $region34: #{tpu_custom_call.1} parent=27 // pred_check_branch
              %174 = sbr.rel (0) target = $region36
            $region35: #{tpu_custom_call.1} parent=27 // pred_region
              %s176 = ssub.s32 16, 1
              loop: start=0, step=1, limit=1
              $region37: #{tpu_custom_call.1} parent=35 // loop_pre_header
                _
              $region38: #{tpu_custom_call.1} parent=35 // loop_header
                %s178 = sphi 0, %s182
                %p179 = scmp.ge.s32.totalorder %s178, 1
                %s183 = sphi %s168, %s168
                %s184 = sphi %s166, %s166
              $region39: #{tpu_custom_call.1} parent=35 // loop_header_branch
                %181 = sbr.rel (%p179) target = $region43
              $region40: #{tpu_custom_call.1} parent=35 // loop_body
                %v185 = vld [vmem:[%s183] sm:%s176]
                %186 = vst [vmem:[%s184] sm:%s176] %v185
                %v187 = vld [vmem:[%s183 + $0x8] sm:%s176]
                %188 = vst [vmem:[%s184 + $0x4] sm:%s176] %v187
                %v189 = vld [vmem:[%s183 + $0x10] sm:%s176]
                %190 = vst [vmem:[%s184 + $0x8] sm:%s176] %v189
                %v191 = vld [vmem:[%s183 + $0x18] sm:%s176]
                %192 = vst [vmem:[%s184 + $0xc] sm:%s176] %v191
                %v193 = vld [vmem:[%s183 + $0x20] sm:%s176]
                %194 = vst [vmem:[%s184 + $0x10] sm:%s176] %v193
                %v195 = vld [vmem:[%s183 + $0x28] sm:%s176]
                %196 = vst [vmem:[%s184 + $0x14] sm:%s176] %v195
                %v197 = vld [vmem:[%s183 + $0x30] sm:%s176]
                %198 = vst [vmem:[%s184 + $0x18] sm:%s176] %v197
                %v199 = vld [vmem:[%s183 + $0x38] sm:%s176]
                %200 = vst [vmem:[%s184 + $0x1c] sm:%s176] %v199
                %v201 = vld [vmem:[%s183 + $0x40] sm:%s176]
                %202 = vst [vmem:[%s184 + $0x20] sm:%s176] %v201
                %v203 = vld [vmem:[%s183 + $0x48] sm:%s176]
                %204 = vst [vmem:[%s184 + $0x24] sm:%s176] %v203
                %v205 = vld [vmem:[%s183 + $0x50] sm:%s176]
                %206 = vst [vmem:[%s184 + $0x28] sm:%s176] %v205
                %v207 = vld [vmem:[%s183 + $0x58] sm:%s176]
                %208 = vst [vmem:[%s184 + $0x2c] sm:%s176] %v207
              $region41: #{tpu_custom_call.1} parent=35 // loop_footer
                %s182 = sadd.s32 1, %s178
              $region42: #{tpu_custom_call.1} parent=35 // loop_footer_branch
                %177 = sbr.rel target = $region38
              $region43: #{tpu_custom_call.1} parent=35 // loop_exit
                _
            $region36: #{tpu_custom_call.1} parent=27 // pred_fallthru
              _
          $region28: #{tpu_custom_call.1} parent=23 // pred_fallthru
            _
          %253 = vnop
        $region24: #{tpu_custom_call.1} parent=19 // pred_fallthru
          _
        // Predicated region
        $region62: #{tpu_custom_call.1} parent=19 // pred_check
          %p254 = pneg %p59
        $region63: #{tpu_custom_call.1} parent=19 // pred_check_branch
          %256 = sbr.rel (%p254) target = $region65
        $region64: #{tpu_custom_call.1} parent=19 // pred_region
          %p257 = scmp.lt.s32.totalorder %s13, 1
          %s258 = scalar_select %p257, %s13, 1
          %s259 = smul.addr %s258, 8
          %s260 = scalar_lea.vmem %s1, %s259
        $region65: #{tpu_custom_call.1} parent=19 // pred_fallthru
          _
        // Predicated region
        $region66: #{tpu_custom_call.1} parent=19 // pred_check
          %p261 = pneg %p85
        $region67: #{tpu_custom_call.1} parent=19 // pred_check_branch
          %263 = sbr.rel (%p261) target = $region69
        $region68: #{tpu_custom_call.1} parent=19 // pred_region
          %p264 = scmp.lt.s32.totalorder %s13, 1
          %s265 = scalar_select %p264, %s13, 1
          %s266 = smul.addr %s265, 4
          %s267 = scalar_lea.vmem %s2, %s266
        $region69: #{tpu_custom_call.1} parent=19 // pred_fallthru
          _
      $region20: #{tpu_custom_call.1} parent=5 // pred_fallthru
        _
      %p268 = scmp.le.s32.totalorder 1, %s13
      %p269 = scmp.lt.s32.totalorder %s13, 3
      %p270 = pnand %p268, %p269
      %p271 = pneg %p270
      // Predicated region
      $region70: #{tpu_custom_call.1} parent=5 // pred_check
        _
      $region71: #{tpu_custom_call.1} parent=5 // pred_check_branch
        %273 = sbr.rel (%p270) target = $region73
      $region72: #{tpu_custom_call.1} parent=5 // pred_region
        %s274 = ssub.s32 %s13, 1
        %s275 = sand.u32 %s26, 1
        %s276 = sand.u32 %s26, 1
        %s277 = smul.addr %s276, 48
        %s278 = scalar_lea.vmem [#allocation2], %s277
        // Predicated region
        $region74: #{tpu_custom_call.1} parent=72 // pred_check
          %p279 = pneg %p39
        $region75: #{tpu_custom_call.1} parent=72 // pred_check_branch
          %281 = sbr.rel (%p279) target = $region77
        $region76: #{tpu_custom_call.1} parent=72 // pred_region
          _
        $region77: #{tpu_custom_call.1} parent=72 // pred_fallthru
          _
        %s282 = sand.u32 %s26, 1
        %s283 = sand.u32 %s26, 1
        %s284 = smul.addr %s283, 48
        %s285 = scalar_lea.vmem [#allocation2], %s284
        %p286 = pneg %p39
        %p287 = pneg %p36
        %p288 = scmp.lt.s32.totalorder %s18, 1
        %s289 = scalar_select %p288, %s18, 1
        %s290 = smul.addr %s289, 8
        %s291 = scalar_lea.vmem %s1, %s290
        %p292 = pneg %p65
        %p293 = pneg %p62
        %p294 = scmp.lt.s32.totalorder %s18, 1
        %s295 = scalar_select %p294, %s18, 1
        %s296 = smul.addr %s295, 4
        %s297 = scalar_lea.vmem %s2, %s296
        %p298 = pneg %p91
        %p299 = pneg %p88
        %p300 = pneg %p112
        %p301 = pneg %p109
        %p302 = pneg %p138
        %p303 = pneg %p135
        %s304 = sand.u32 %s125, 1
        %s305 = scalar_lea.sflag [#allocation4], %s304
        %s306 = sand.u32 %s125, 1
        %s307 = smul.addr %s306, 8
        %s308 = scalar_lea.vmem [#allocation3], %s307
        %p309 = scmp.lt.s32.totalorder %s18, 1
        %s310 = scalar_select %p309, %s18, 1
        %s311 = smul.addr %s310, 8
        %s312 = scalar_lea.vmem %s1, %s311
        %p313 = scmp.lt.s32.totalorder %s18, 1
        %s314 = scalar_select %p313, %s18, 1
        %s315 = smul.addr %s314, 4
        %s316 = scalar_lea.vmem %s2, %s315
        %v317 = vld [vmem:[%s312] sm:$0xff]
        %v318 = vld [vmem:[%s316] sm:$0xf]
        %v319 = vld [vmem:[%s278] sm:$0xf]
        %v320 = vld [vmem:[%s278 + $0x4] sm:$0xf]
        %v321 = vld [vmem:[%s278 + $0x8] sm:$0xf]
        %v322 = vld [vmem:[%s278 + $0xc] sm:$0xf]
        %v323 = vunpack.c.l.bf16 %v319
        %v324 = vunpack.c.l.bf16 %v320
        %v325 = vunpack.c.l.bf16 %v321
        %v326 = vunpack.c.l.bf16 %v322
        %v327 = vmul.f32 %v323, %v317
        %v328 = vmul.f32 %v324, %v317
        %v329 = vmul.f32 %v325, %v317
        %v330 = vmul.f32 %v326, %v317
        %v331 = vrot.slane %v327, 4
        %v332 = vadd.f32 %v327, %v331
        %v333 = vrot.slane %v332, 2
        %v334 = vadd.f32 %v332, %v333
        %v335 = vrot.slane %v334, 1
        %v336 = vadd.f32 %v334, %v335
        %v337 = vrot.slane %v328, 4
        %v338 = vadd.f32 %v328, %v337
        %v339 = vrot.slane %v338, 2
        %v340 = vadd.f32 %v338, %v339
        %v341 = vrot.slane %v340, 1
        %v342 = vadd.f32 %v340, %v341
        %v343 = vrot.slane %v329, 4
        %v344 = vadd.f32 %v329, %v343
        %v345 = vrot.slane %v344, 2
        %v346 = vadd.f32 %v344, %v345
        %v347 = vrot.slane %v346, 1
        %v348 = vadd.f32 %v346, %v347
        %v349 = vrot.slane %v330, 4
        %v350 = vadd.f32 %v330, %v349
        %v351 = vrot.slane %v350, 2
        %v352 = vadd.f32 %v350, %v351
        %v353 = vrot.slane %v352, 1
        %v354 = vadd.f32 %v352, %v353
        %v355 = vld [vmem:[%s278 + $0x10] sm:$0xf]
        %v356 = vld [vmem:[%s278 + $0x14] sm:$0xf]
        %v357 = vld [vmem:[%s278 + $0x18] sm:$0xf]
        %v358 = vld [vmem:[%s278 + $0x1c] sm:$0xf]
        %v359 = vunpack.c.l.bf16 %v355
        %v360 = vunpack.c.l.bf16 %v356
        %v361 = vunpack.c.l.bf16 %v357
        %v362 = vunpack.c.l.bf16 %v358
        %v363 = vmul.f32 %v359, %v317
        %v364 = vmul.f32 %v360, %v317
        %v365 = vmul.f32 %v361, %v317
        %v366 = vmul.f32 %v362, %v317
        %v367 = vrot.slane %v363, 4
        %v368 = vadd.f32 %v363, %v367
        %v369 = vrot.slane %v368, 2
        %v370 = vadd.f32 %v368, %v369
        %v371 = vrot.slane %v370, 1
        %v372 = vadd.f32 %v370, %v371
        %v373 = vrot.slane %v364, 4
        %v374 = vadd.f32 %v364, %v373
        %v375 = vrot.slane %v374, 2
        %v376 = vadd.f32 %v374, %v375
        %v377 = vrot.slane %v376, 1
        %v378 = vadd.f32 %v376, %v377
        %v379 = vrot.slane %v365, 4
        %v380 = vadd.f32 %v365, %v379
        %v381 = vrot.slane %v380, 2
        %v382 = vadd.f32 %v380, %v381
        %v383 = vrot.slane %v382, 1
        %v384 = vadd.f32 %v382, %v383
        %v385 = vrot.slane %v366, 4
        %v386 = vadd.f32 %v366, %v385
        %v387 = vrot.slane %v386, 2
        %v388 = vadd.f32 %v386, %v387
        %v389 = vrot.slane %v388, 1
        %v390 = vadd.f32 %v388, %v389
        %v391 = vld [vmem:[%s278 + $0x20] sm:$0xf]
        %v392 = vld [vmem:[%s278 + $0x24] sm:$0xf]
        %v393 = vld [vmem:[%s278 + $0x28] sm:$0xf]
        %v394 = vld [vmem:[%s278 + $0x2c] sm:$0xf]
        %v395 = vunpack.c.l.bf16 %v391
        %v396 = vunpack.c.l.bf16 %v392
        %v397 = vunpack.c.l.bf16 %v393
        %v398 = vunpack.c.l.bf16 %v394
        %v399 = vmul.f32 %v395, %v317
        %v400 = vmul.f32 %v396, %v317
        %v401 = vmul.f32 %v397, %v317
        %v402 = vmul.f32 %v398, %v317
        %v403 = vrot.slane %v399, 4
        %v404 = vadd.f32 %v399, %v403
        %v405 = vrot.slane %v404, 2
        %v406 = vadd.f32 %v404, %v405
        %v407 = vrot.slane %v406, 1
        %v408 = vadd.f32 %v406, %v407
        %v409 = vrot.slane %v400, 4
        %v410 = vadd.f32 %v400, %v409
        %v411 = vrot.slane %v410, 2
        %v412 = vadd.f32 %v410, %v411
        %v413 = vrot.slane %v412, 1
        %v414 = vadd.f32 %v412, %v413
        %v415 = vrot.slane %v401, 4
        %v416 = vadd.f32 %v401, %v415
        %v417 = vrot.slane %v416, 2
        %v418 = vadd.f32 %v416, %v417
        %v419 = vrot.slane %v418, 1
        %v420 = vadd.f32 %v418, %v419
        %v421 = vrot.slane %v402, 4
        %v422 = vadd.f32 %v402, %v421
        %v423 = vrot.slane %v422, 2
        %v424 = vadd.f32 %v422, %v423
        %v425 = vrot.slane %v424, 1
        %v426 = vadd.f32 %v424, %v425
        %v427 = vadd.f32 %v336, %v372
        %v428 = vadd.f32 %v342, %v378
        %v429 = vadd.f32 %v348, %v384
        %v430 = vadd.f32 %v354, %v390
        %v431 = vmul.f32 %v427, 0.33333334
        %v432 = vmul.f32 %v428, 0.33333334
        %v433 = vmul.f32 %v429, 0.33333334
        %v434 = vmul.f32 %v430, 0.33333334
        %v435 = vsub.f32 %v336, %v431
        %v436 = vsub.f32 %v342, %v432
        %v437 = vsub.f32 %v348, %v433
        %v438 = vsub.f32 %v354, %v434
        %v439 = vsub.f32 %v372, %v431
        %v440 = vsub.f32 %v378, %v432
        %v441 = vsub.f32 %v384, %v433
        %v442 = vsub.f32 %v390, %v434
        %v443 = vsub.f32 0.0, %v427
        %v444 = vsub.f32 0.0, %v428
        %v445 = vsub.f32 0.0, %v429
        %v446 = vsub.f32 0.0, %v430
        %v447 = vmul.f32 %v443, 0.33333334
        %v448 = vmul.f32 %v444, 0.33333334
        %v449 = vmul.f32 %v445, 0.33333334
        %v450 = vmul.f32 %v446, 0.33333334
        %v451 = vmul.f32 %v408, 0.5
        %v452 = vmul.f32 %v414, 0.5
        %v453 = vmul.f32 %v420, 0.5
        %v454 = vmul.f32 %v426, 0.5
        %v455 = vmul.f32 %v435, %v435
        %v456 = vmul.f32 %v436, %v436
        %v457 = vmul.f32 %v437, %v437
        %v458 = vmul.f32 %v438, %v438
        %v459 = vmul.f32 %v439, %v439
        %v460 = vmul.f32 %v440, %v440
        %v461 = vmul.f32 %v441, %v441
        %v462 = vmul.f32 %v442, %v442
        %v463 = vadd.f32 %v455, %v459
        %v464 = vadd.f32 %v456, %v460
        %v465 = vadd.f32 %v457, %v461
        %v466 = vadd.f32 %v458, %v462
        %v467 = vmul.f32 %v447, %v447
        %v468 = vmul.f32 %v448, %v448
        %v469 = vmul.f32 %v449, %v449
        %v470 = vmul.f32 %v450, %v450
        %v471 = vadd.f32 %v463, %v467
        %v472 = vadd.f32 %v464, %v468
        %v473 = vadd.f32 %v465, %v469
        %v474 = vadd.f32 %v466, %v470
        %v475 = vmul.f32 %v451, 2.0
        %v476 = vmul.f32 %v452, 2.0
        %v477 = vmul.f32 %v453, 2.0
        %v478 = vmul.f32 %v454, 2.0
        %v479 = vmul.f32 %v475, %v451
        %v480 = vmul.f32 %v476, %v452
        %v481 = vmul.f32 %v477, %v453
        %v482 = vmul.f32 %v478, %v454
        %v483 = vadd.f32 %v471, %v479
        %v484 = vadd.f32 %v472, %v480
        %v485 = vadd.f32 %v473, %v481
        %v486 = vadd.f32 %v474, %v482
        %v487 = vadd.f32 %v483, 1e-12
        %v488 = vadd.f32 %v484, 1e-12
        %v489 = vadd.f32 %v485, 1e-12
        %v490 = vadd.f32 %v486, 1e-12
        %v491 = vrsqrt.pop %v487
        %v492 = vrsqrt.pop %v488
        %v493 = vrsqrt.pop %v489
        %v494 = vrsqrt.pop %v490
        %v495 = vmul.f32 %v483, %v491
        %v496 = vmul.f32 %v484, %v492
        %v497 = vmul.f32 %v485, %v493
        %v498 = vmul.f32 %v486, %v494
        %v499 = vmul.f32 %v435, %v491
        %v500 = vmul.f32 %v436, %v492
        %v501 = vmul.f32 %v437, %v493
        %v502 = vmul.f32 %v438, %v494
        %v503 = vmul.f32 %v439, %v491
        %v504 = vmul.f32 %v440, %v492
        %v505 = vmul.f32 %v441, %v493
        %v506 = vmul.f32 %v442, %v494
        %v507 = vmul.f32 %v451, %v491
        %v508 = vmul.f32 %v452, %v492
        %v509 = vmul.f32 %v453, %v493
        %v510 = vmul.f32 %v454, %v494
        %v511 = vld [vmem:[%s3] sm:$0xff]
        %v512 = vld [vmem:[%s3 + $0x8] sm:$0xff]
        %v513 = vld [vmem:[%s3 + $0x10] sm:$0xff]
        %v514 = vld [vmem:[%s3 + $0x18] sm:$0xff]
        %v515 = vld [vmem:[%s3 + $0x20] sm:$0xff]
        %v516 = vld [vmem:[%s3 + $0x28] sm:$0xff]
        %v517 = vld [vmem:[%s3 + $0x30] sm:$0xff]
        %v518 = vld [vmem:[%s3 + $0x38] sm:$0xff]
        %v519 = vld [vmem:[%s3 + $0x40] sm:$0xff]
        %v520 = vld [vmem:[%s3 + $0x48] sm:$0xff]
        %v521 = vld [vmem:[%s3 + $0x50] sm:$0xff]
        %v522 = vld [vmem:[%s3 + $0x58] sm:$0xff]
        %v523 = vld [vmem:[%s3 + $0x60] sm:$0xff]
        %v524 = vld [vmem:[%s3 + $0x68] sm:$0xff]
        %v525 = vld [vmem:[%s3 + $0x70] sm:$0xff]
        %v526 = vld [vmem:[%s3 + $0x78] sm:$0xff]
        %v527 = vld [vmem:[%s3 + $0x80] sm:$0xff]
        %v528 = vld [vmem:[%s3 + $0x88] sm:$0xff]
        %v529 = vld [vmem:[%s3 + $0x90] sm:$0xff]
        %v530 = vld [vmem:[%s3 + $0x98] sm:$0xff]
        %532 = vset.pattern.permute.xlu0 0
        %533 = vperm.xlu0 %532, %v511
        %v534 = vpop.permute.xlu0 %533
        %537 = vset.pattern.permute.xlu0 0
        %538 = vperm.xlu0 %537, %v512
        %v539 = vpop.permute.xlu0 %538
        %542 = vset.pattern.permute.xlu0 0
        %543 = vperm.xlu0 %542, %v513
        %v544 = vpop.permute.xlu0 %543
        %547 = vset.pattern.permute.xlu0 0
        %548 = vperm.xlu0 %547, %v514
        %v549 = vpop.permute.xlu0 %548
        %v551 = vmul.f32 %v427, %v534
        %v552 = vmul.f32 %v427, %v539
        %v553 = vmul.f32 %v427, %v544
        %v554 = vmul.f32 %v427, %v549
        %v555 = vmul.f32 %v428, %v534
        %v556 = vmul.f32 %v428, %v539
        %v557 = vmul.f32 %v428, %v544
        %v558 = vmul.f32 %v428, %v549
        %v559 = vmul.f32 %v429, %v534
        %v560 = vmul.f32 %v429, %v539
        %v561 = vmul.f32 %v429, %v544
        %v562 = vmul.f32 %v429, %v549
        %v563 = vmul.f32 %v430, %v534
        %v564 = vmul.f32 %v430, %v539
        %v565 = vmul.f32 %v430, %v544
        %v566 = vmul.f32 %v430, %v549
        %568 = vset.pattern.permute.xlu0 0
        %569 = vperm.xlu0 %568, %v515
        %v570 = vpop.permute.xlu0 %569
        %573 = vset.pattern.permute.xlu0 0
        %574 = vperm.xlu0 %573, %v516
        %v575 = vpop.permute.xlu0 %574
        %578 = vset.pattern.permute.xlu0 0
        %579 = vperm.xlu0 %578, %v517
        %v580 = vpop.permute.xlu0 %579
        %583 = vset.pattern.permute.xlu0 0
        %584 = vperm.xlu0 %583, %v518
        %v585 = vpop.permute.xlu0 %584
        %v587 = vmul.f32 %v495, %v570
        %v588 = vmul.f32 %v495, %v575
        %v589 = vmul.f32 %v495, %v580
        %v590 = vmul.f32 %v495, %v585
        %v591 = vmul.f32 %v496, %v570
        %v592 = vmul.f32 %v496, %v575
        %v593 = vmul.f32 %v496, %v580
        %v594 = vmul.f32 %v496, %v585
        %v595 = vmul.f32 %v497, %v570
        %v596 = vmul.f32 %v497, %v575
        %v597 = vmul.f32 %v497, %v580
        %v598 = vmul.f32 %v497, %v585
        %v599 = vmul.f32 %v498, %v570
        %v600 = vmul.f32 %v498, %v575
        %v601 = vmul.f32 %v498, %v580
        %v602 = vmul.f32 %v498, %v585
        %v603 = vadd.f32 %v551, %v587
        %v604 = vadd.f32 %v552, %v588
        %v605 = vadd.f32 %v553, %v589
        %v606 = vadd.f32 %v554, %v590
        %v607 = vadd.f32 %v555, %v591
        %v608 = vadd.f32 %v556, %v592
        %v609 = vadd.f32 %v557, %v593
        %v610 = vadd.f32 %v558, %v594
        %v611 = vadd.f32 %v559, %v595
        %v612 = vadd.f32 %v560, %v596
        %v613 = vadd.f32 %v561, %v597
        %v614 = vadd.f32 %v562, %v598
        %v615 = vadd.f32 %v563, %v599
        %v616 = vadd.f32 %v564, %v600
        %v617 = vadd.f32 %v565, %v601
        %v618 = vadd.f32 %v566, %v602
        %620 = vset.pattern.permute.xlu0 0
        %621 = vperm.xlu0 %620, %v519
        %v622 = vpop.permute.xlu0 %621
        %625 = vset.pattern.permute.xlu0 0
        %626 = vperm.xlu0 %625, %v520
        %v627 = vpop.permute.xlu0 %626
        %630 = vset.pattern.permute.xlu0 0
        %631 = vperm.xlu0 %630, %v521
        %v632 = vpop.permute.xlu0 %631
        %635 = vset.pattern.permute.xlu0 0
        %636 = vperm.xlu0 %635, %v522
        %v637 = vpop.permute.xlu0 %636
        %v639 = vadd.f32 %v603, %v622
        %v640 = vadd.f32 %v604, %v627
        %v641 = vadd.f32 %v605, %v632
        %v642 = vadd.f32 %v606, %v637
        %v643 = vadd.f32 %v607, %v622
        %v644 = vadd.f32 %v608, %v627
        %v645 = vadd.f32 %v609, %v632
        %v646 = vadd.f32 %v610, %v637
        %v647 = vadd.f32 %v611, %v622
        %v648 = vadd.f32 %v612, %v627
        %v649 = vadd.f32 %v613, %v632
        %v650 = vadd.f32 %v614, %v637
        %v651 = vadd.f32 %v615, %v622
        %v652 = vadd.f32 %v616, %v627
        %v653 = vadd.f32 %v617, %v632
        %v654 = vadd.f32 %v618, %v637
        %v655 = vtanh.pop %v639
        %v656 = vtanh.pop %v640
        %v657 = vtanh.pop %v641
        %v658 = vtanh.pop %v642
        %v659 = vtanh.pop %v643
        %v660 = vtanh.pop %v644
        %v661 = vtanh.pop %v645
        %v662 = vtanh.pop %v646
        %v663 = vtanh.pop %v647
        %v664 = vtanh.pop %v648
        %v665 = vtanh.pop %v649
        %v666 = vtanh.pop %v650
        %v667 = vtanh.pop %v651
        %v668 = vtanh.pop %v652
        %v669 = vtanh.pop %v653
        %v670 = vtanh.pop %v654
        %672 = vset.pattern.permute.xlu0 0
        %673 = vperm.xlu0 %672, %v523
        %v674 = vpop.permute.xlu0 %673
        %677 = vset.pattern.permute.xlu0 0
        %678 = vperm.xlu0 %677, %v524
        %v679 = vpop.permute.xlu0 %678
        %682 = vset.pattern.permute.xlu0 0
        %683 = vperm.xlu0 %682, %v525
        %v684 = vpop.permute.xlu0 %683
        %687 = vset.pattern.permute.xlu0 0
        %688 = vperm.xlu0 %687, %v526
        %v689 = vpop.permute.xlu0 %688
        %v691 = vmul.f32 %v655, %v674
        %v692 = vmul.f32 %v656, %v679
        %v693 = vmul.f32 %v657, %v684
        %v694 = vmul.f32 %v658, %v689
        %v695 = vmul.f32 %v659, %v674
        %v696 = vmul.f32 %v660, %v679
        %v697 = vmul.f32 %v661, %v684
        %v698 = vmul.f32 %v662, %v689
        %v699 = vmul.f32 %v663, %v674
        %v700 = vmul.f32 %v664, %v679
        %v701 = vmul.f32 %v665, %v684
        %v702 = vmul.f32 %v666, %v689
        %v703 = vmul.f32 %v667, %v674
        %v704 = vmul.f32 %v668, %v679
        %v705 = vmul.f32 %v669, %v684
        %v706 = vmul.f32 %v670, %v689
        %v707 = vadd.f32 %v691, %v692
        %v708 = vadd.f32 %v707, %v693
        %v709 = vadd.f32 %v708, %v694
        %v710 = vrot.slane %v709, 4
        %v711 = vadd.f32 %v709, %v710
        %v712 = vrot.slane %v711, 2
        %v713 = vadd.f32 %v711, %v712
        %v714 = vrot.slane %v713, 1
        %v715 = vadd.f32 %v713, %v714
        %v716 = vadd.f32 %v695, %v696
        %v717 = vadd.f32 %v716, %v697
        %v718 = vadd.f32 %v717, %v698
        %v719 = vrot.slane %v718, 4
        %v720 = vadd.f32 %v718, %v719
        %v721 = vrot.slane %v720, 2
        %v722 = vadd.f32 %v720, %v721
        %v723 = vrot.slane %v722, 1
        %v724 = vadd.f32 %v722, %v723
        %v725 = vadd.f32 %v699, %v700
        %v726 = vadd.f32 %v725, %v701
        %v727 = vadd.f32 %v726, %v702
        %v728 = vrot.slane %v727, 4
        %v729 = vadd.f32 %v727, %v728
        %v730 = vrot.slane %v729, 2
        %v731 = vadd.f32 %v729, %v730
        %v732 = vrot.slane %v731, 1
        %v733 = vadd.f32 %v731, %v732
        %v734 = vadd.f32 %v703, %v704
        %v735 = vadd.f32 %v734, %v705
        %v736 = vadd.f32 %v735, %v706
        %v737 = vrot.slane %v736, 4
        %v738 = vadd.f32 %v736, %v737
        %v739 = vrot.slane %v738, 2
        %v740 = vadd.f32 %v738, %v739
        %v741 = vrot.slane %v740, 1
        %v742 = vadd.f32 %v740, %v741
        %v743 = vadd.f32 %v715, -0.07083937
        %v744 = vadd.f32 %v724, -0.07083937
        %v745 = vadd.f32 %v733, -0.07083937
        %v746 = vadd.f32 %v742, -0.07083937
        %748 = vset.pattern.permute.xlu0 0
        %749 = vperm.xlu0 %748, %v527
        %v750 = vpop.permute.xlu0 %749
        %753 = vset.pattern.permute.xlu0 0
        %754 = vperm.xlu0 %753, %v528
        %v755 = vpop.permute.xlu0 %754
        %758 = vset.pattern.permute.xlu0 0
        %759 = vperm.xlu0 %758, %v529
        %v760 = vpop.permute.xlu0 %759
        %763 = vset.pattern.permute.xlu0 0
        %764 = vperm.xlu0 %763, %v530
        %v765 = vpop.permute.xlu0 %764
        %v767 = vmul.f32 %v655, %v750
        %v768 = vmul.f32 %v656, %v755
        %v769 = vmul.f32 %v657, %v760
        %v770 = vmul.f32 %v658, %v765
        %v771 = vmul.f32 %v659, %v750
        %v772 = vmul.f32 %v660, %v755
        %v773 = vmul.f32 %v661, %v760
        %v774 = vmul.f32 %v662, %v765
        %v775 = vmul.f32 %v663, %v750
        %v776 = vmul.f32 %v664, %v755
        %v777 = vmul.f32 %v665, %v760
        %v778 = vmul.f32 %v666, %v765
        %v779 = vmul.f32 %v667, %v750
        %v780 = vmul.f32 %v668, %v755
        %v781 = vmul.f32 %v669, %v760
        %v782 = vmul.f32 %v670, %v765
        %v783 = vadd.f32 %v767, %v768
        %v784 = vadd.f32 %v783, %v769
        %v785 = vadd.f32 %v784, %v770
        %v786 = vrot.slane %v785, 4
        %v787 = vadd.f32 %v785, %v786
        %v788 = vrot.slane %v787, 2
        %v789 = vadd.f32 %v787, %v788
        %v790 = vrot.slane %v789, 1
        %v791 = vadd.f32 %v789, %v790
        %v792 = vadd.f32 %v771, %v772
        %v793 = vadd.f32 %v792, %v773
        %v794 = vadd.f32 %v793, %v774
        %v795 = vrot.slane %v794, 4
        %v796 = vadd.f32 %v794, %v795
        %v797 = vrot.slane %v796, 2
        %v798 = vadd.f32 %v796, %v797
        %v799 = vrot.slane %v798, 1
        %v800 = vadd.f32 %v798, %v799
        %v801 = vadd.f32 %v775, %v776
        %v802 = vadd.f32 %v801, %v777
        %v803 = vadd.f32 %v802, %v778
        %v804 = vrot.slane %v803, 4
        %v805 = vadd.f32 %v803, %v804
        %v806 = vrot.slane %v805, 2
        %v807 = vadd.f32 %v805, %v806
        %v808 = vrot.slane %v807, 1
        %v809 = vadd.f32 %v807, %v808
        %v810 = vadd.f32 %v779, %v780
        %v811 = vadd.f32 %v810, %v781
        %v812 = vadd.f32 %v811, %v782
        %v813 = vrot.slane %v812, 4
        %v814 = vadd.f32 %v812, %v813
        %v815 = vrot.slane %v814, 2
        %v816 = vadd.f32 %v814, %v815
        %v817 = vrot.slane %v816, 1
        %v818 = vadd.f32 %v816, %v817
        %v819 = vadd.f32 %v791, 0.017589265
        %v820 = vadd.f32 %v800, 0.017589265
        %v821 = vadd.f32 %v809, 0.017589265
        %v822 = vadd.f32 %v818, 0.017589265
        %v823 = vmul.f32 %v819, %v499
        %v824 = vmul.f32 %v820, %v500
        %v825 = vmul.f32 %v821, %v501
        %v826 = vmul.f32 %v822, %v502
        %v827 = vadd.f32 %v743, %v823
        %v828 = vadd.f32 %v744, %v824
        %v829 = vadd.f32 %v745, %v825
        %v830 = vadd.f32 %v746, %v826
        %v832 = vrot.slane %v318, 1
        %v833 = vrot.slane %v318, 2
        %v834 = vrot.slane %v318, 3
        %v839 = vmul.f32 %v827, %v318
        %v840 = vmul.f32 %v828, %v832
        %v841 = vmul.f32 %v829, %v833
        %v842 = vmul.f32 %v830, %v834
        %v843 = vmul.f32 %v819, %v503
        %v844 = vmul.f32 %v820, %v504
        %v845 = vmul.f32 %v821, %v505
        %v846 = vmul.f32 %v822, %v506
        %v847 = vadd.f32 %v743, %v843
        %v848 = vadd.f32 %v744, %v844
        %v849 = vadd.f32 %v745, %v845
        %v850 = vadd.f32 %v746, %v846
        %v851 = vmul.f32 %v847, %v318
        %v852 = vmul.f32 %v848, %v832
        %v853 = vmul.f32 %v849, %v833
        %v854 = vmul.f32 %v850, %v834
        %v855 = vmul.f32 %v819, %v507
        %v856 = vmul.f32 %v820, %v508
        %v857 = vmul.f32 %v821, %v509
        %v858 = vmul.f32 %v822, %v510
        %v859 = vmul.f32 %v855, %v318
        %v860 = vmul.f32 %v856, %v832
        %v861 = vmul.f32 %v857, %v833
        %v862 = vmul.f32 %v858, %v834
        %v863 = vlaneseq
        %v864 = vshrl.u32 %v863, 7
        %v865 = vsub.s32 0, %v864
        %v866 = vrot.slane %v839, %v865
        %v867 = vlaneseq
        %v868 = vshrl.u32 %v867, 7
        %v869 = vsub.s32 0, %v868
        %v870 = vrot.slane %v840, %v869
        %v871 = vlaneseq
        %v872 = vshrl.u32 %v871, 7
        %v873 = vsub.s32 0, %v872
        %v874 = vrot.slane %v841, %v873
        %v875 = vlaneseq
        %v876 = vshrl.u32 %v875, 7
        %v877 = vsub.s32 0, %v876
        %v878 = vrot.slane %v842, %v877
        %v879 = vmul.f32 %v323, %v866
        %v880 = vmul.f32 %v324, %v870
        %v881 = vmul.f32 %v325, %v874
        %v882 = vmul.f32 %v326, %v878
        %v883 = vadd.f32 %v879, %v880
        %v884 = vadd.f32 %v883, %v881
        %v885 = vadd.f32 %v884, %v882
        %v886 = vlaneseq
        %v887 = vshrl.u32 %v886, 7
        %v888 = vsub.s32 0, %v887
        %v889 = vrot.slane %v851, %v888
        %v890 = vlaneseq
        %v891 = vshrl.u32 %v890, 7
        %v892 = vsub.s32 0, %v891
        %v893 = vrot.slane %v852, %v892
        %v894 = vlaneseq
        %v895 = vshrl.u32 %v894, 7
        %v896 = vsub.s32 0, %v895
        %v897 = vrot.slane %v853, %v896
        %v898 = vlaneseq
        %v899 = vshrl.u32 %v898, 7
        %v900 = vsub.s32 0, %v899
        %v901 = vrot.slane %v854, %v900
        %v902 = vmul.f32 %v359, %v889
        %v903 = vmul.f32 %v360, %v893
        %v904 = vmul.f32 %v361, %v897
        %v905 = vmul.f32 %v362, %v901
        %v906 = vadd.f32 %v902, %v903
        %v907 = vadd.f32 %v906, %v904
        %v908 = vadd.f32 %v907, %v905
        %v909 = vadd.f32 %v885, %v908
        %v910 = vlaneseq
        %v911 = vshrl.u32 %v910, 7
        %v912 = vsub.s32 0, %v911
        %v913 = vrot.slane %v859, %v912
        %v914 = vlaneseq
        %v915 = vshrl.u32 %v914, 7
        %v916 = vsub.s32 0, %v915
        %v917 = vrot.slane %v860, %v916
        %v918 = vlaneseq
        %v919 = vshrl.u32 %v918, 7
        %v920 = vsub.s32 0, %v919
        %v921 = vrot.slane %v861, %v920
        %v922 = vlaneseq
        %v923 = vshrl.u32 %v922, 7
        %v924 = vsub.s32 0, %v923
        %v925 = vrot.slane %v862, %v924
        %v926 = vmul.f32 %v395, %v913
        %v927 = vmul.f32 %v396, %v917
        %v928 = vmul.f32 %v397, %v921
        %v929 = vmul.f32 %v398, %v925
        %v930 = vadd.f32 %v926, %v927
        %v931 = vadd.f32 %v930, %v928
        %v932 = vadd.f32 %v931, %v929
        %v933 = vadd.f32 %v909, %v932
        %934 = vst [vmem:[%s308] sm:$0xff] %v933
        %s935 = sand.u32 %s125, 1
        %s936 = scalar_lea.sflag [#allocation4], %s935
        %s937 = sand.u32 %s125, 1
        %s938 = smul.addr %s937, 8
        %s939 = scalar_lea.vmem [#allocation3], %s938
        // Predicated region
        $region78: #{tpu_custom_call.1} parent=72 // pred_check
          %p940 = pneg %p135
        $region79: #{tpu_custom_call.1} parent=72 // pred_check_branch
          %942 = sbr.rel (%p940) target = $region81
        $region80: #{tpu_custom_call.1} parent=72 // pred_region
          %s944 = ssub.s32 128, 128
          %945 = vsyncadd %s936, %s944
          %s946 = smul.addr %s18, 128
          %s947 = scalar_lea.hbm %s4, %s946
          %s949 = sshll.u32 %s939, 4
          %s950 = int_to_ptr.vmem [resolvable:$true] %s949
          %952 = dma.vmem_to_hbm [thread:$0]  %s950, 128, %s947, %s936
        $region81: #{tpu_custom_call.1} parent=72 // pred_fallthru
          _
      $region73: #{tpu_custom_call.1} parent=5 // pred_fallthru
        _
      %p953 = scmp.le.s32.totalorder 2, %s13
      // Predicated region
      $region82: #{tpu_custom_call.1} parent=5 // pred_check
        %p954 = pneg %p953
      $region83: #{tpu_custom_call.1} parent=5 // pred_check_branch
        %956 = sbr.rel (%p954) target = $region85
      $region84: #{tpu_custom_call.1} parent=5 // pred_region
        %s957 = ssub.s32 %s13, 2
        // Predicated region
        $region86: #{tpu_custom_call.1} parent=84 // pred_check
          %p958 = pneg %p141
        $region87: #{tpu_custom_call.1} parent=84 // pred_check_branch
          %960 = sbr.rel (%p958) target = $region89
        $region88: #{tpu_custom_call.1} parent=84 // pred_region
          %s961 = sand.u32 %s126, 1
          %s962 = scalar_lea.sflag [#allocation4], %s961
          %s963 = sand.u32 %s126, 1
          %s964 = smul.addr %s963, 8
          %s965 = scalar_lea.vmem [#allocation3], %s964
          %966 = dma.done %s962, 128
        $region89: #{tpu_custom_call.1} parent=84 // pred_fallthru
          _
      $region85: #{tpu_custom_call.1} parent=5 // pred_fallthru
        _
    $region6: #{tpu_custom_call.1} parent=1 // loop_footer
      %s17 = sadd.s32 1, %s13
    $region7: #{tpu_custom_call.1} parent=1 // loop_footer_branch
      %12 = sbr.rel target = $region3
    $region8: #{tpu_custom_call.1} parent=1 // loop_exit
      _
    %967 = vsyncpa [#allocation4], 1
    %s968 = scalar_lea.sflag [#allocation4], 1
    %969 = vsyncpa %s968, 1

</llo_original>
